<compile_context>
chip_gen: v6e
topology: v6e:2x2x1
jax: 0.10.0
libtpu: 0.0.40
codegen_flags: <defaults>
</compile_context>

<pallas_src>
import math
from functools import partial

import jax
import jax.numpy as jnp
from jax import lax
from jax.experimental import pallas as pl
from jax.experimental.pallas import tpu as pltpu

_LANE = 128
_TWO_PI = 2.0 * math.pi
_MAX_TILE_ROWS = 4096          # 4096 x 128 x 4B = 2 MiB per f32 block


def _hash_u32(x):
    # "lowbias32" integer finalizer: cheap, VALU-only, good avalanche.
    x = x ^ (x >> 16)
    x = x * jnp.uint32(0x7FEB352D)
    x = x ^ (x >> 15)
    x = x * jnp.uint32(0x846CA68B)
    x = x ^ (x >> 16)
    return x


def _bits_to_unit_float(bits):
    # Exponent-bitcast trick: [1,2) with 23 random mantissa bits, minus 1.0.
    f = lax.bitcast_convert_type((bits >> 9) | jnp.uint32(0x3F800000), jnp.float32)
    return f - 1.0


def _gaussian_noise_kernel(seed_ref, x_ref, o_ref, *, std, tile_rows):
    half = tile_rows // 2
    pairs_per_tile = half * _LANE

    tile = pl.program_id(0)
    base = tile.astype(jnp.uint32) * jnp.uint32(pairs_per_tile)

    # Global pair index for every element of the top half of this tile.
    row = lax.broadcasted_iota(jnp.uint32, (half, _LANE), 0)
    col = lax.broadcasted_iota(jnp.uint32, (half, _LANE), 1)
    pair_idx = base + row * jnp.uint32(_LANE) + col

    seed_u = _hash_u32(seed_ref[0].astype(jnp.uint32))
    bits1 = _hash_u32(pair_idx ^ seed_u)
    bits2 = _hash_u32(bits1 + jnp.uint32(0x9E3779B9))   # cascaded second draw

    u1 = 1.0 - _bits_to_unit_float(bits1)   # (0, 1]: keeps log finite
    u2 = _bits_to_unit_float(bits2)         # [0, 1)

    # Box-Muller: one (u1, u2) pair yields TWO independent normals.
    r = jnp.sqrt(-2.0 * jnp.log(u1))
    c = jnp.cos(_TWO_PI * u2)
    # sin from cos: |sin| = sqrt(1 - c^2); for uniform theta the sign of sin
    # is independent of cos, so take it from a spare random bit (bit 0 of
    # bits2 is unused by the mantissa, which takes bits 9..31).
    s_mag = jnp.sqrt(jnp.maximum(1.0 - c * c, 0.0))
    sign = jnp.where((bits2 & jnp.uint32(1)) == 0, jnp.float32(1.0), jnp.float32(-1.0))
    s = sign * s_mag

    # Two direct half-tile writes; scale+add+store in the output dtype
    # (bf16 add on v6e/v7x) -- no full-tile f32 temp, no sublane concat.
    top = pl.ds(0, half)
    bot = pl.ds(half, half)
    o_ref[top, :] = x_ref[top, :] + (std * (r * c)).astype(o_ref.dtype)
    o_ref[bot, :] = x_ref[bot, :] + (std * (r * s)).astype(o_ref.dtype)


def _choose_tile_rows(rows):
    # Target >=4 grid steps for big inputs (feeds both v7x TensorCores under
    # dimension_semantics=("parallel",)), cap at 2 MiB f32 blocks so the
    # double-buffered in+out footprint stays under v5e's 16 MiB scoped-VMEM
    # default, and round to 16 sublanes (bf16 packing; even split for halves).
    target = max((rows + 3) // 4, 16)
    tile = min(_MAX_TILE_ROWS, target)
    return ((tile + 15) // 16) * 16


def gaussian_noise(x, std, seed):
    """x + N(0, std) noise, elementwise (matches torch.normal(zeros_like(x), std))."""
    orig_shape = x.shape
    orig_dtype = x.dtype
    total = x.size

    rows = -(-total // _LANE)           # lane-dense (rows, 128) slab
    padded_total = rows * _LANE

    flat = jnp.ravel(x)
    if padded_total != total:
        # Only when x.size is not a multiple of 128 (rare for activations).
        flat = jnp.pad(flat, (0, padded_total - total))
    x2 = flat.reshape(rows, _LANE)

    tile_rows = _choose_tile_rows(rows)
    grid = -(-rows // tile_rows)        # partial final block is masked by Pallas

    seed_arr = jnp.asarray([seed], dtype=jnp.int32)

    # std baked in as a static Python float (matches nn.Module __init__ arg).
    kernel = partial(_gaussian_noise_kernel, std=float(std), tile_rows=tile_rows)

    out2 = pl.pallas_call(
        kernel,
        out_shape=jax.ShapeDtypeStruct((rows, _LANE), orig_dtype),
        grid_spec=pltpu.PrefetchScalarGridSpec(
            num_scalar_prefetch=1,
            grid=(grid,),
            in_specs=[pl.BlockSpec((tile_rows, _LANE), lambda i, seed: (i, 0))],
            out_specs=pl.BlockSpec((tile_rows, _LANE), lambda i, seed: (i, 0)),
        ),
        compiler_params=pltpu.CompilerParams(
            dimension_semantics=("parallel",),
        ),
    )(seed_arr, x2)

    if padded_total == total:
        return out2.reshape(orig_shape)
    return out2.reshape(-1)[:total].reshape(orig_shape)


if __name__ == "__main__":
    key = jax.random.PRNGKey(0)
    B, C, H, W = 2, 4, 16, 16  # NCHW, matching typical conv input
    x = jax.random.normal(key, (B, C, H, W), dtype=jnp.float32)

    std = 0.1
    seed = 1234

    y = gaussian_noise(x, std, seed)
    y = jax.block_until_ready(y)

    # Sanity: shape/dtype preserved; noise statistics close to N(0, std).
    assert y.shape == x.shape and y.dtype == x.dtype
    noise = y - x
    est_std = float(jnp.std(noise))
    est_mean = float(jnp.mean(noise))
    assert 0.05 < est_std < 0.2, f"noise std off: {est_std}"
    assert abs(est_mean) < 0.05, f"noise mean off: {est_mean}"

    print("KERNEL_OK")
</pallas_src>

<mosaic_0001>
module attributes {stable_mosaic.version = 11 : i64} {
  func.func @_gaussian_noise_kernel(%arg0: i32, %arg1: memref<1xi32, #tpu.memory_space<smem>>, %arg2: memref<16x128xf32, #tpu.memory_space<vmem>>, %arg3: memref<16x128xf32, #tpu.memory_space<vmem>>) attributes {dimension_semantics = [#tpu.dimension_semantics<parallel>], iteration_bounds = array<i64: 1>, scalar_prefetch = 1 : i64, scratch_operands = 0 : i64, tpu.core_type = #tpu.core_type<tc>, window_params = [{transform_indices = @transform_0, window_bounds = array<i64: 16, 128>}, {transform_indices = @transform_1, window_bounds = array<i64: 16, 128>}]} {
    %c1024_i32 = arith.constant 1024 : i32
    %0 = arith.muli %arg0, %c1024_i32 : i32
    %1 = tpu.iota {dimensions = array<i32: 0>} : vector<8x128xi32>
    %2 = tpu.iota {dimensions = array<i32: 1>} : vector<8x128xi32>
    %c128_i32 = arith.constant 128 : i32
    %3 = vector.broadcast %c128_i32 : i32 to vector<8x128xi32>
    %4 = arith.muli %1, %3 : vector<8x128xi32>
    %5 = vector.broadcast %0 : i32 to vector<8x128xi32>
    %6 = arith.addi %5, %4 : vector<8x128xi32>
    %7 = arith.addi %6, %2 : vector<8x128xi32>
    %c0 = arith.constant 0 : index
    %8 = memref.load %arg1[%c0] : memref<1xi32, #tpu.memory_space<smem>>
    %c16_i32 = arith.constant 16 : i32
    %9 = arith.shrui %8, %c16_i32 : i32
    %10 = arith.xori %8, %9 : i32
    %c2146121005_i32 = arith.constant 2146121005 : i32
    %11 = arith.muli %10, %c2146121005_i32 : i32
    %c15_i32 = arith.constant 15 : i32
    %12 = arith.shrui %11, %c15_i32 : i32
    %13 = arith.xori %11, %12 : i32
    %c-2073254261_i32 = arith.constant -2073254261 : i32
    %14 = arith.muli %13, %c-2073254261_i32 : i32
    %c16_i32_0 = arith.constant 16 : i32
    %15 = arith.shrui %14, %c16_i32_0 : i32
    %16 = arith.xori %14, %15 : i32
    %17 = vector.broadcast %16 : i32 to vector<8x128xi32>
    %18 = arith.xori %7, %17 : vector<8x128xi32>
    %c16_i32_1 = arith.constant 16 : i32
    %19 = vector.broadcast %c16_i32_1 : i32 to vector<8x128xi32>
    %20 = arith.shrui %18, %19 : vector<8x128xi32>
    %21 = arith.xori %18, %20 : vector<8x128xi32>
    %c2146121005_i32_2 = arith.constant 2146121005 : i32
    %22 = vector.broadcast %c2146121005_i32_2 : i32 to vector<8x128xi32>
    %23 = arith.muli %21, %22 : vector<8x128xi32>
    %c15_i32_3 = arith.constant 15 : i32
    %24 = vector.broadcast %c15_i32_3 : i32 to vector<8x128xi32>
    %25 = arith.shrui %23, %24 : vector<8x128xi32>
    %26 = arith.xori %23, %25 : vector<8x128xi32>
    %c-2073254261_i32_4 = arith.constant -2073254261 : i32
    %27 = vector.broadcast %c-2073254261_i32_4 : i32 to vector<8x128xi32>
    %28 = arith.muli %26, %27 : vector<8x128xi32>
    %c16_i32_5 = arith.constant 16 : i32
    %29 = vector.broadcast %c16_i32_5 : i32 to vector<8x128xi32>
    %30 = arith.shrui %28, %29 : vector<8x128xi32>
    %31 = arith.xori %28, %30 : vector<8x128xi32>
    %c-1640531527_i32 = arith.constant -1640531527 : i32
    %32 = vector.broadcast %c-1640531527_i32 : i32 to vector<8x128xi32>
    %33 = arith.addi %31, %32 : vector<8x128xi32>
    %c16_i32_6 = arith.constant 16 : i32
    %34 = vector.broadcast %c16_i32_6 : i32 to vector<8x128xi32>
    %35 = arith.shrui %33, %34 : vector<8x128xi32>
    %36 = arith.xori %33, %35 : vector<8x128xi32>
    %c2146121005_i32_7 = arith.constant 2146121005 : i32
    %37 = vector.broadcast %c2146121005_i32_7 : i32 to vector<8x128xi32>
    %38 = arith.muli %36, %37 : vector<8x128xi32>
    %c15_i32_8 = arith.constant 15 : i32
    %39 = vector.broadcast %c15_i32_8 : i32 to vector<8x128xi32>
    %40 = arith.shrui %38, %39 : vector<8x128xi32>
    %41 = arith.xori %38, %40 : vector<8x128xi32>
    %c-2073254261_i32_9 = arith.constant -2073254261 : i32
    %42 = vector.broadcast %c-2073254261_i32_9 : i32 to vector<8x128xi32>
    %43 = arith.muli %41, %42 : vector<8x128xi32>
    %c16_i32_10 = arith.constant 16 : i32
    %44 = vector.broadcast %c16_i32_10 : i32 to vector<8x128xi32>
    %45 = arith.shrui %43, %44 : vector<8x128xi32>
    %46 = arith.xori %43, %45 : vector<8x128xi32>
    %c9_i32 = arith.constant 9 : i32
    %47 = vector.broadcast %c9_i32 : i32 to vector<8x128xi32>
    %48 = arith.shrui %31, %47 : vector<8x128xi32>
    %c1065353216_i32 = arith.constant 1065353216 : i32
    %49 = vector.broadcast %c1065353216_i32 : i32 to vector<8x128xi32>
    %50 = arith.ori %48, %49 : vector<8x128xi32>
    %51 = tpu.bitcast %50 : vector<8x128xi32> -> vector<8x128xf32>
    %cst = arith.constant 1.000000e+00 : f32
    %52 = vector.broadcast %cst : f32 to vector<8x128xf32>
    %53 = arith.subf %51, %52 : vector<8x128xf32>
    %cst_11 = arith.constant 1.000000e+00 : f32
    %54 = vector.broadcast %cst_11 : f32 to vector<8x128xf32>
    %55 = arith.subf %54, %53 : vector<8x128xf32>
    %c9_i32_12 = arith.constant 9 : i32
    %56 = vector.broadcast %c9_i32_12 : i32 to vector<8x128xi32>
    %57 = arith.shrui %46, %56 : vector<8x128xi32>
    %c1065353216_i32_13 = arith.constant 1065353216 : i32
    %58 = vector.broadcast %c1065353216_i32_13 : i32 to vector<8x128xi32>
    %59 = arith.ori %57, %58 : vector<8x128xi32>
    %60 = tpu.bitcast %59 : vector<8x128xi32> -> vector<8x128xf32>
    %cst_14 = arith.constant 1.000000e+00 : f32
    %61 = vector.broadcast %cst_14 : f32 to vector<8x128xf32>
    %62 = arith.subf %60, %61 : vector<8x128xf32>
    %63 = math.log %55 : vector<8x128xf32>
    %cst_15 = arith.constant -2.000000e+00 : f32
    %64 = vector.broadcast %cst_15 : f32 to vector<8x128xf32>
    %65 = arith.mulf %64, %63 : vector<8x128xf32>
    %66 = math.sqrt %65 : vector<8x128xf32>
    %cst_16 = arith.constant 6.28318548 : f32
    %67 = vector.broadcast %cst_16 : f32 to vector<8x128xf32>
    %68 = arith.mulf %67, %62 : vector<8x128xf32>
    %69 = math.cos %68 : vector<8x128xf32>
    %70 = arith.mulf %69, %69 : vector<8x128xf32>
    %cst_17 = arith.constant 1.000000e+00 : f32
    %71 = vector.broadcast %cst_17 : f32 to vector<8x128xf32>
    %72 = arith.subf %71, %70 : vector<8x128xf32>
    %cst_18 = arith.constant 0.000000e+00 : f32
    %73 = vector.broadcast %cst_18 : f32 to vector<8x128xf32>
    %74 = arith.maximumf %72, %73 : vector<8x128xf32>
    %75 = math.sqrt %74 : vector<8x128xf32>
    %c1_i32 = arith.constant 1 : i32
    %76 = vector.broadcast %c1_i32 : i32 to vector<8x128xi32>
    %77 = arith.andi %46, %76 : vector<8x128xi32>
    %c0_i32 = arith.constant 0 : i32
    %78 = vector.broadcast %c0_i32 : i32 to vector<8x128xi32>
    %79 = arith.cmpi eq, %77, %78 : vector<8x128xi32>
    %cst_19 = arith.constant 1.000000e+00 : f32
    %cst_20 = arith.constant -1.000000e+00 : f32
    %80 = vector.broadcast %cst_19 : f32 to vector<8x128xf32>
    %81 = vector.broadcast %cst_20 : f32 to vector<8x128xf32>
    %82 = arith.select %79, %80, %81 : vector<8x128xi1>, vector<8x128xf32>
    %83 = arith.mulf %82, %75 : vector<8x128xf32>
    %c0_21 = arith.constant 0 : index
    %c0_22 = arith.constant 0 : index
    %84 = vector.load %arg2[%c0_21, %c0_22] : memref<16x128xf32, #tpu.memory_space<vmem>>, vector<8x128xf32>
    %85 = arith.mulf %66, %69 : vector<8x128xf32>
    %cst_23 = arith.constant 1.000000e-01 : f32
    %86 = vector.broadcast %cst_23 : f32 to vector<8x128xf32>
    %87 = arith.mulf %86, %85 : vector<8x128xf32>
    %88 = arith.addf %84, %87 : vector<8x128xf32>
    %c0_24 = arith.constant 0 : index
    %c0_25 = arith.constant 0 : index
    %89 = vector.load %arg3[%c0_24, %c0_25] : memref<16x128xf32, #tpu.memory_space<vmem>>, vector<8x128xf32>
    tpu.vector_store %arg3[%c0_24, %c0_25], %88 {strides = array<i32>} : memref<16x128xf32, #tpu.memory_space<vmem>>, vector<8x128xf32>,
    %c8 = arith.constant 8 : index
    %c0_26 = arith.constant 0 : index
    %90 = vector.load %arg2[%c8, %c0_26] : memref<16x128xf32, #tpu.memory_space<vmem>>, vector<8x128xf32>
    %91 = arith.mulf %66, %83 : vector<8x128xf32>
    %cst_27 = arith.constant 1.000000e-01 : f32
    %92 = vector.broadcast %cst_27 : f32 to vector<8x128xf32>
    %93 = arith.mulf %92, %91 : vector<8x128xf32>
    %94 = arith.addf %90, %93 : vector<8x128xf32>
    %c8_28 = arith.constant 8 : index
    %c0_29 = arith.constant 0 : index
    %95 = vector.load %arg3[%c8_28, %c0_29] : memref<16x128xf32, #tpu.memory_space<vmem>>, vector<8x128xf32>
    tpu.vector_store %arg3[%c8_28, %c0_29], %94 {strides = array<i32>} : memref<16x128xf32, #tpu.memory_space<vmem>>, vector<8x128xf32>,
    return
  }
  func.func @transform_0(%arg0: i32, %arg1: memref<1xi32, #tpu.memory_space<smem>>) -> (i32, i32) {
    %c0_i32 = arith.constant 0 : i32
    %c0_i32_0 = arith.constant 0 : i32
    return %arg0, %c0_i32 : i32, i32
  }
  func.func @transform_1(%arg0: i32, %arg1: memref<1xi32, #tpu.memory_space<smem>>) -> (i32, i32) {
    %c0_i32 = arith.constant 0 : i32
    %c0_i32_0 = arith.constant 0 : i32
    return %arg0, %c0_i32 : i32, i32
  }
}

</mosaic_0001>

<llo_original>
// kernel: tpu_custom_call.1
$region0: #{tpu_custom_call.1}
  #allocation0 [shape = 'u32[]', space=smem, size = 0x4, offset = 0x4, fixed_abs, tag = 'smem constant byte address 0x4 - core index']
  #allocation1 [shape = 'u32[144,128]{1,0:T(1,128)}', space=vmem, size = 0x12000, scoped, tag = 'internal scratch']
  #allocation2 [shape = 's32[1]{0}', space=sflag, size = 0x4, scoped, tag = 'scoped memory for tpu_custom_call.1']
  #allocation3 [shape = 's32[1]{0:T(128)S(6)}', space=smem, size = 0x200, scoped, tag = 'prefetched SMEM operand 0']
  %s0 = inlined_call_operand.<no memory space> [shape: s32[1], index: 0, kind: input, shape index: {}]
  %s1 = inlined_call_operand.hbm [shape: f32[16,128], index: 1, kind: input, shape index: {}]
  %s2 = inlined_call_operand.hbm [shape: f32[16,128], index: 2, kind: output, shape index: {}]
  %s3 = sld [smem:[#allocation0]]
  $region18: #{tpu_custom_call.1} parent=0
    _
  %s5 = ssub.s32 1, %s3
  %s6 = scalar_select 0, %s5, %s3
  %7 = sst [smem:[#allocation3]] %s0
  $region1: #{tpu_custom_call.1} parent=0
    #allocation4 [shape = 'u8[8192]{0}', space=vmem, size = 0x2000, scoped, tag = 'input window, operand 1, single buffered']
    #allocation5 [shape = 's32[1]{0}', space=sflag, size = 0x4, scoped, tag = 'scoped memory for tpu_custom_call.1']
    #allocation6 [shape = 's32[1]{0}', space=sflag, size = 0x4, scoped, tag = 'scoped memory for tpu_custom_call.1']
    #allocation7 [shape = 'u8[8192]{0}', space=vmem, size = 0x2000, scoped, tag = 'output window, operand 0, single buffered']
    %8 = vsyncpa [#allocation5], 0
    %9 = vsyncpa [#allocation6], 0
    // Predicated region
    $region2: #{tpu_custom_call.1} parent=1 // pred_check
      _
    $region3: #{tpu_custom_call.1} parent=1 // pred_check_branch
      %11 = sbr.rel (0) target = $region5
    $region4: #{tpu_custom_call.1} parent=1 // pred_region
      %s13 = ssub.s32 256, 256
      %14 = vsyncadd [#allocation5], %s13
      %s15 = sshll.u32 [#allocation4], 4
      %s16 = int_to_ptr.vmem [resolvable:$true] %s15
      %21 = dma.hbm_to_vmem [thread:$0]  %s1, 256, %s16, [#allocation5], 128, 128, 8
    $region5: #{tpu_custom_call.1} parent=1 // pred_fallthru
      _
    // Predicated region
    $region6: #{tpu_custom_call.1} parent=1 // pred_check
      _
    $region7: #{tpu_custom_call.1} parent=1 // pred_check_branch
      %23 = sbr.rel (0) target = $region9
    $region8: #{tpu_custom_call.1} parent=1 // pred_region
      %24 = dma.done [#allocation5], 256
    $region9: #{tpu_custom_call.1} parent=1 // pred_fallthru
      _
    %s25 = smul.u32 0, 1024
    %v26 = vlaneseq
    %v27 = vshrl.u32 %v26, 7
    %v28 = vlaneseq
    %v29 = vand.u32 %v28, 127
    %v30 = vmul.u32 %v27, 128
    %v31 = vstv %s25
    %v32 = vadd.s32 %v31, %v30
    %v33 = vadd.s32 %v32, %v29
    %s34 = sld [smem:[#allocation3]]
    %s35 = sshrl.u32 %s34, 16
    %s36 = sxor.u32 %s34, %s35
    %s37 = smul.u32 %s36, 2146121005
    %s38 = sshrl.u32 %s37, 15
    %s39 = sxor.u32 %s37, %s38
    %s40 = smul.u32 %s39, 2221713035
    %s41 = sshrl.u32 %s40, 16
    %s42 = sxor.u32 %s40, %s41
    %v43 = vstv %s42
    %v44 = vxor.u32 %v33, %v43
    %v45 = vshrl.u32 %v44, 16
    %v46 = vxor.u32 %v44, %v45
    %v47 = vmul.u32 %v46, 2146121005
    %v48 = vshrl.u32 %v47, 15
    %v49 = vxor.u32 %v47, %v48
    %v50 = vmul.u32 %v49, 2221713035
    %v51 = vshrl.u32 %v50, 16
    %v52 = vxor.u32 %v50, %v51
    %v53 = vadd.s32 %v52, 2654435769
    %v54 = vshrl.u32 %v53, 16
    %v55 = vxor.u32 %v53, %v54
    %v56 = vmul.u32 %v55, 2146121005
    %v57 = vshrl.u32 %v56, 15
    %v58 = vxor.u32 %v56, %v57
    %v59 = vmul.u32 %v58, 2221713035
    %v60 = vshrl.u32 %v59, 16
    %v61 = vxor.u32 %v59, %v60
    %v62 = vshrl.u32 %v52, 9
    %v63 = vor.u32 %v62, 1065353216
    %v65 = vsub.f32 %v63, 1.0
    %v66 = vsub.f32 1.0, %v65
    %v67 = vshrl.u32 %v61, 9
    %v68 = vor.u32 %v67, 1065353216
    %v70 = vsub.f32 %v68, 1.0
    %v71 = vlog2.pop %v66
    %v72 = vmul.f32 %v71, 0.6931472
    %v73 = vmul.f32 %v72, -2.0
    %v74 = vrsqrt.pop %v73
    %v75 = vmul.f32 %v73, %v74
    %vm76 = vcmp.eq.f32.partialorder %v73, inf
    %v77 = vsel %vm76, %v73, %v75
    %vm78 = vcmp.eq.f32.partialorder %v73, 0.0
    %v79 = vand.u32 %v73, 2147483648
    %v80 = vsel %vm78, %v79, %v77
    %v81 = vmul.f32 %v70, 6.2831855
    %v82 = vand.u32 2147483647, %v81
    %vm83 = vcmp.le.f32.partialorder %v82, 0.7853982
    %vm84 = vcmp.lt.s32.totalorder %v81, 0
    %v85 = vand.u32 %v81, 2139095040
    %v86 = vshrl.u32 %v85, 23
    %v87 = vsub.s32 %v86, 127
    %v88 = vand.u32 2147483647, %v81
    %v89 = vand.u32 %v88, 8388607
    %v90 = vor.u32 %v89, 8388608
    %v91 = vsub.s32 0, %v90
    %v92 = vadd.s32 %v87, 1
    %vm93 = vcmp.gt.s32.totalorder %v92, 0
    %v94 = vsel %vm93, %v92, 0
    %v95 = vshrl.u32 %v94, 5
    %v96 = vand.u32 %v94, 31
    %v97 = vsub.s32 32, %v96
    %v98 = vshrl.u32 683565275, %v97
    %v99 = vshll.u32 683565275, %v96
    %v100 = vshrl.u32 2475754826, %v97
    %v101 = vor.u32 %v99, %v100
    %v102 = vshll.u32 2475754826, %v96
    %v103 = vshrl.u32 2131351028, %v97
    %v104 = vor.u32 %v102, %v103
    %v105 = vshll.u32 2131351028, %v96
    %v106 = vshrl.u32 2102212464, %v97
    %v107 = vor.u32 %v105, %v106
    %v108 = vshll.u32 2102212464, %v96
    %v109 = vshrl.u32 920167782, %v97
    %v110 = vor.u32 %v108, %v109
    %v111 = vshll.u32 920167782, %v96
    %v112 = vshrl.u32 1326507024, %v97
    %v113 = vor.u32 %v111, %v112
    %vm114 = vcmp.lt.s32.totalorder %v95, 1
    %vm115 = vcmp.lt.s32.totalorder %v95, 2
    %vm116 = vcmp.lt.s32.totalorder %v95, 3
    %vm117 = vcmp.lt.s32.totalorder %v95, 4
    %v118 = vsel %vm114, %v98, %v101
    %v119 = vsel %vm117, %v107, 2102212464
    %v120 = vsel %vm116, %v104, %v119
    %v121 = vsel %vm115, %v118, %v120
    %v122 = vsel %vm114, %v101, %v104
    %v123 = vsel %vm117, %v110, 920167782
    %v124 = vsel %vm116, %v107, %v123
    %v125 = vsel %vm115, %v122, %v124
    %v126 = vsel %vm114, %v104, %v107
    %v127 = vsel %vm117, %v113, 1326507024
    %v128 = vsel %vm116, %v110, %v127
    %v129 = vsel %vm115, %v126, %v128
    %v130 = vshll.u32 %v90, 8
    %v131 = vmul.u32.u64.compose %v130, %v129
    %v132 = vextract.low.u32 %v131
    %v133 = vextract.high.u32 %v131
    %v134 = vmul.u32.u64.compose %v130, %v125
    %v135 = vextract.low.u32 %v134
    %v136 = vextract.high.u32 %v134
    %v137 = vmul.u32 %v130, %v121
    %v138 = vadd.s32 %v133, %v135
    %vm139 = vc.u32 %v133, %v135
    %v140 = vadd.s32 %v136, 1
    %v141 = vsel %vm139, %v140, %v136
    %v142 = vadd.s32 %v137, %v141
    %v143 = vadd.s32 %v142, 536870912
    %v144 = vshrl.u32 %v143, 30
    %v145 = vshll.u32 %v144, 30
    %v146 = vsub.s32 %v142, %v145
    %vm147 = vcmp.lt.s32.totalorder %v146, 0
    %v148 = vsub.s32 0, %v146
    %v149 = vsel %vm147, %v148, %v146
    %v150 = vclz %v149
    %v151 = vsub.s32 %v150, 2
    %vm152 = vcmp.gt.s32.totalorder 0, %v151
    %v153 = vsel %vm152, 0, %v151
    %v154 = vsub.s32 32, %v153
    %v155 = vshll.u32 %v146, %v153
    %v156 = vshrl.u32 %v138, %v154
    %v157 = vor.u32 %v155, %v156
    %v158 = vsub.s32 4294967266, %v153
    %v159 = vadd.s32 %v158, 127
    %v160 = vshll.u32 %v159, 23
    %v161 = vor.u32 4788187, %v160
    %v162 = vand.u32 2147483647, %v161
    %v164 = vcvt.s32.f32 %v157
    %v165 = vmul.f32 %v164, %v162
    %v166 = vxor.u32 %v165, 2147483648
    %v167 = vsel %vm84, %v166, %v165
    %v168 = vsub.s32 4, %v144
    %v169 = vsel %vm84, %v168, %v144
    %v170 = vsel %vm83, %v81, %v167
    %v171 = vsel %vm83, 0, %v169
    %v172 = vcosq.f32.pop %v170
    %v173 = vsinq.f32.pop %v170
    %vm174 = vweird.f32 %v81
    %v175 = vand.u32 %v171, 3
    %vm176 = vcmp.lt.s32.totalorder %v175, 2
    %vm177 = vcmp.eq.s32.totalorder %v175, 0
    %v178 = vxor.u32 %v173, 2147483648
    %v179 = vsel %vm177, %v172, %v178
    %vm180 = vcmp.eq.s32.totalorder %v175, 2
    %v181 = vxor.u32 %v172, 2147483648
    %v182 = vsel %vm180, %v181, %v173
    %v183 = vsel %vm176, %v179, %v182
    %v184 = vsel %vm174, nan, %v183
    %v185 = vmul.f32 %v184, %v184
    %v186 = vsub.f32 1.0, %v185
    %v187 = vmax.f32 %v186, 0.0
    %v188 = vrsqrt.pop %v187
    %v189 = vmul.f32 %v187, %v188
    %vm190 = vcmp.eq.f32.partialorder %v187, inf
    %v191 = vsel %vm190, %v187, %v189
    %vm192 = vcmp.eq.f32.partialorder %v187, 0.0
    %v193 = vand.u32 %v187, 2147483648
    %v194 = vsel %vm192, %v193, %v191
    %v195 = vand.u32 %v61, 1
    %vm196 = vcmp.eq.s32.totalorder %v195, 0
    %v197 = vsel %vm196, 1.0, -1.0
    %v198 = vmul.f32 %v197, %v194
    %v199 = vld [vmem:[#allocation4] sm:$0xff]
    %v200 = vmul.f32 %v80, %v184
    %v201 = vmul.f32 %v200, 0.1
    %v202 = vadd.f32 %v199, %v201
    %203 = vst [vmem:[#allocation7] sm:$0xff] %v202
    %v204 = vld [vmem:[#allocation4 + $0x8] sm:$0xff]
    %v205 = vmul.f32 %v80, %v198
    %v206 = vmul.f32 %v205, 0.1
    %v207 = vadd.f32 %v204, %v206
    %208 = vst [vmem:[#allocation7 + $0x8] sm:$0xff] %v207
    // Predicated region
    $region10: #{tpu_custom_call.1} parent=1 // pred_check
      _
    $region11: #{tpu_custom_call.1} parent=1 // pred_check_branch
      %210 = sbr.rel (0) target = $region13
    $region12: #{tpu_custom_call.1} parent=1 // pred_region
      %s212 = ssub.s32 256, 256
      %213 = vsyncadd [#allocation6], %s212
      %s214 = sshll.u32 [#allocation7], 4
      %s215 = int_to_ptr.vmem [resolvable:$true] %s214
      %220 = dma.vmem_to_hbm [thread:$0]  %s215, 256, %s2, [#allocation6], 128, 128, 8
    $region13: #{tpu_custom_call.1} parent=1 // pred_fallthru
      _
    // Predicated region
    $region14: #{tpu_custom_call.1} parent=1 // pred_check
      _
    $region15: #{tpu_custom_call.1} parent=1 // pred_check_branch
      %222 = sbr.rel (0) target = $region17
    $region16: #{tpu_custom_call.1} parent=1 // pred_region
      %223 = dma.done [#allocation6], 256
    $region17: #{tpu_custom_call.1} parent=1 // pred_fallthru
      _
    %224 = vsyncpa [#allocation5], 1
    %225 = vsyncpa [#allocation6], 1

</llo_original>
